<compile_context>
chip_gen: v7x
topology: tpu7x:2x2x1
jax: 0.10.0
libtpu: 0.0.40
codegen_flags: <defaults>
</compile_context>

<pallas_src>
import functools

import jax
import jax.numpy as jnp
import numpy as np
from jax.experimental import pallas as pl
from jax.experimental.pallas import tpu as pltpu

_EPS = 1e-5


def _round_up(x, m):
    return (x + m - 1) // m * m


# ----------------------------------------------------------------------------
# Fused BasicBlock kernel (one image per grid step)
# ----------------------------------------------------------------------------
def _basic_block_kernel(*refs, stride, proj, Wpo, Lp, M, c0, C1p, C2p):
    """Whole BasicBlock on one image, activations in (C, padded-flat-HW) layout.

    A spatial point (r, s) of the zero-padded (Hout+2, Wout+2) output grid is
    stored at lane index r*Wpo + s.  Every 3x3 tap is then a contiguous lane
    slice, so each conv becomes a single im2col matmul with K = 9*Cin.
    """
    if proj:
        (x_ref, w1_ref, s1_ref, b1_ref, w2_ref, s2_ref, b2_ref,
         wsc_ref, ssc_ref, bsc_ref, mask_ref, out_ref) = refs
    else:
        (x_ref, w1_ref, s1_ref, b1_ref, w2_ref, s2_ref, b2_ref,
         mask_ref, out_ref) = refs
        wsc_ref = ssc_ref = bsc_ref = None

    mask = mask_ref[...]                       # (1, Lp): 1 at interior, 0 at pad

    # ---- conv1 (3x3, stride) + bn1 + relu -----------------------------------
    # Computed at every padded-flat output position, then masked so the halo
    # seen by conv2 is exact zeros.
    taps1 = []
    if stride == 1:
        xg = x_ref[0]                          # (C1p, Lp + 2*c0) guarded flat
        for ky in range(3):
            for kx in range(3):
                off = c0 + (ky - 1) * Wpo + (kx - 1)
                taps1.append(xg[:, off:off + Lp])
    else:
        xg = None
        # stride 2: taps come from the 4 polyphase images (built in wrapper),
        # each already at output resolution -> still contiguous lane slices.
        for ky in range(3):
            for kx in range(3):
                ph = x_ref[0, 2 * (ky % 2) + (kx % 2)]     # (C1p, Lp + c0)
                off = c0 + (ky // 2 - 1) * Wpo + (kx // 2 - 1)
                taps1.append(ph[:, off:off + Lp])
    p1 = jnp.concatenate(taps1, axis=0)                    # (9*C1p, Lp)
    y1 = jnp.dot(w1_ref[...], p1, preferred_element_type=jnp.float32)
    mid = jnp.maximum(y1 * s1_ref[...] + b1_ref[...], 0.0) * mask   # (C2p, Lp)

    # ---- conv2 (3x3, stride 1) + bn2 ----------------------------------------
    taps2 = []
    for ky in range(3):
        for kx in range(3):
            off = c0 + (ky - 1) * Wpo + (kx - 1)
            taps2.append(jax.lax.slice(mid, (0, off), (C2p, off + M)))
    p2 = jnp.concatenate(taps2, axis=0)                    # (9*C2p, M)
    y2 = jnp.dot(w2_ref[...], p2, preferred_element_type=jnp.float32)
    y2 = y2 * s2_ref[...] + b2_ref[...]                    # (C2p, M)

    # ---- shortcut -------------------------------------------------------------
    if proj:
        if stride == 1:
            xs = xg[:, 2 * c0:2 * c0 + M]                  # (C1p, M)
        else:
            xs = x_ref[0, 3][:, c0:c0 + M]                 # odd/odd polyphase
        sc = jnp.dot(wsc_ref[...], xs, preferred_element_type=jnp.float32)
        sc = sc * ssc_ref[...] + bsc_ref[...]
    else:
        sc = xg[:, 2 * c0:2 * c0 + M]                      # identity (C1p==C2p)

    out_ref[0] = jnp.maximum(y2 + sc, 0.0)


# ----------------------------------------------------------------------------
# Wrapper: parameter folding / packing + pallas_call
# ----------------------------------------------------------------------------
def _fold_bn(gamma, beta, mean, var, eps=_EPS):
    scale = gamma / jnp.sqrt(var + eps)
    shift = beta - mean * scale
    return scale, shift


def _pack_conv3x3(w_oihw, C2p, C1p):
    """(O, I, 3, 3) -> (C2p, 9*C1p) matching the kernel's tap order (ky, kx)."""
    O, I = w_oihw.shape[0], w_oihw.shape[1]
    blocks = []
    for ky in range(3):
        for kx in range(3):
            blk = jnp.pad(w_oihw[:, :, ky, kx], ((0, C2p - O), (0, C1p - I)))
            blocks.append(blk)
    return jnp.concatenate(blocks, axis=1)


def _pad_vec(v, Cp):
    return jnp.pad(v, (0, Cp - v.shape[0])).reshape(Cp, 1)


def basic_block_forward(x_nchw, params, *, stride):
    """Pallas implementation of BasicBlock.forward(x) (inference-mode BN)."""
    N, Cin, H, W = x_nchw.shape
    planes = params["conv1_w"].shape[0]
    assert stride in (1, 2)
    if stride == 2:
        assert H % 2 == 0 and W % 2 == 0
    proj = (stride != 1) or (Cin != planes)

    C1p = _round_up(Cin, 8)
    C2p = _round_up(planes, 8)
    Hout = (H - 1) // stride + 1
    Wout = (W - 1) // stride + 1
    Hpo, Wpo = Hout + 2, Wout + 2
    Lp = Hpo * Wpo                       # padded-flat output length
    c0 = Wpo + 1                         # flat index of interior origin
    M = (Hout - 1) * Wpo + Wout          # contiguous range covering all interior

    # ---- fold BN + pack weights (im2col layout, channel-padded to x8) -------
    s1, b1 = _fold_bn(*params["bn1"])
    s2, b2 = _fold_bn(*params["bn2"])
    w1m = _pack_conv3x3(params["conv1_w"], C2p, C1p)
    w2m = _pack_conv3x3(params["conv2_w"], C2p, C2p)

    # ---- activations: channel-pad + spatial-pad + flatten (done once) -------
    xpad = jnp.pad(x_nchw, ((0, 0), (0, C1p - Cin), (1, 1), (1, 1)))
    if stride == 1:
        x_in = xpad.reshape(N, C1p, Lp)
        x_in = jnp.pad(x_in, ((0, 0), (0, 0), (c0, c0)))   # guard zeros
        x_spec = pl.BlockSpec((1, C1p, Lp + 2 * c0), lambda n: (n, 0, 0))
    else:
        phases = []
        for p in (0, 1):
            for q in (0, 1):
                ph = xpad[:, :, p::2, q::2]                # (N,C1p,Hout+1,Wout+1)
                ph = jnp.pad(ph, ((0, 0), (0, 0),
                                  (0, Hpo - ph.shape[2]),
                                  (0, Wpo - ph.shape[3])))
                phases.append(ph.reshape(N, C1p, Lp))
        x_in = jnp.stack(phases, axis=1)                   # (N,4,C1p,Lp)
        x_in = jnp.pad(x_in, ((0, 0), (0, 0), (0, 0), (c0, 0)))
        x_spec = pl.BlockSpec((1, 4, C1p, Lp + c0), lambda n: (n, 0, 0, 0))

    # ---- interior mask over the padded-flat output grid (static) ------------
    rr = np.arange(Lp) // Wpo
    cc = np.arange(Lp) % Wpo
    mask_np = ((rr >= 1) & (rr <= Hout) & (cc >= 1) & (cc <= Wout))
    mask = jnp.asarray(mask_np.astype(np.float32)).reshape(1, Lp)

    args = [x_in, w1m, _pad_vec(s1, C2p), _pad_vec(b1, C2p),
            w2m, _pad_vec(s2, C2p), _pad_vec(b2, C2p)]
    in_specs = [x_spec,
                pl.BlockSpec((C2p, 9 * C1p), lambda n: (0, 0)),
                pl.BlockSpec((C2p, 1), lambda n: (0, 0)),
                pl.BlockSpec((C2p, 1), lambda n: (0, 0)),
                pl.BlockSpec((C2p, 9 * C2p), lambda n: (0, 0)),
                pl.BlockSpec((C2p, 1), lambda n: (0, 0)),
                pl.BlockSpec((C2p, 1), lambda n: (0, 0))]
    if proj:
        ssc, bsc = _fold_bn(*params["sc_bn"])
        wsc = jnp.pad(params["sc_w"][:, :, 0, 0],
                      ((0, C2p - planes), (0, C1p - Cin)))
        args += [wsc, _pad_vec(ssc, C2p), _pad_vec(bsc, C2p)]
        in_specs += [pl.BlockSpec((C2p, C1p), lambda n: (0, 0)),
                     pl.BlockSpec((C2p, 1), lambda n: (0, 0)),
                     pl.BlockSpec((C2p, 1), lambda n: (0, 0))]
    args.append(mask)
    in_specs.append(pl.BlockSpec((1, Lp), lambda n: (0, 0)))

    kernel = functools.partial(_basic_block_kernel, stride=stride, proj=proj,
                               Wpo=Wpo, Lp=Lp, M=M, c0=c0, C1p=C1p, C2p=C2p)

    flops = 2 * N * (9 * C1p * C2p * Lp + 9 * C2p * C2p * M
                     + (C1p * C2p * M if proj else 0))
    bytes_accessed = sum(int(np.prod(a.shape)) * 4 for a in args) + N * C2p * M * 4

    out = pl.pallas_call(
        kernel,
        out_shape=jax.ShapeDtypeStruct((N, C2p, M), jnp.float32),
        grid=(N,),
        in_specs=in_specs,
        out_specs=pl.BlockSpec((1, C2p, M), lambda n: (n, 0, 0)),
        compiler_params=pltpu.CompilerParams(dimension_semantics=("parallel",)),
        cost_estimate=pl.CostEstimate(flops=int(flops), transcendentals=0,
                                      bytes_accessed=int(bytes_accessed)),
    )(*args)

    # rows [c0, c0+M) of the padded-flat grid -> (N, planes, Hout, Wout) NCHW
    out = jnp.pad(out, ((0, 0), (0, 0), (c0, Lp - c0 - M)))
    out = out.reshape(N, C2p, Hpo, Wpo)[:, :planes, 1:Hout + 1, 1:Wout + 1]
    return out


# ----------------------------------------------------------------------------
# Pure-JAX reference (identical semantics) + parameter init
# ----------------------------------------------------------------------------
def _ref_forward(x, params, *, stride):
    def conv(x, w, s, p):
        return jax.lax.conv_general_dilated(
            x, w, (s, s), [(p, p), (p, p)],
            dimension_numbers=("NCHW", "OIHW", "NCHW"))

    def bn(x, stats):
        g, b, m, v = stats
        return ((x - m[None, :, None, None])
                / jnp.sqrt(v + _EPS)[None, :, None, None]
                * g[None, :, None, None] + b[None, :, None, None])

    in_planes = x.shape[1]
    planes = params["conv1_w"].shape[0]
    out = jax.nn.relu(bn(conv(x, params["conv1_w"], stride, 1), params["bn1"]))
    out = bn(conv(out, params["conv2_w"], 1, 1), params["bn2"])
    if stride != 1 or in_planes != planes:
        sc = bn(conv(x, params["sc_w"], stride, 0), params["sc_bn"])
    else:
        sc = x
    return jax.nn.relu(out + sc)


def _init_params(key, in_planes, planes):
    ks = jax.random.split(key, 6)

    def bn_stats(k):
        k0, k1, k2, k3 = jax.random.split(k, 4)
        gamma = jax.random.uniform(k0, (planes,), jnp.float32, 0.5, 1.5)
        beta = 0.1 * jax.random.normal(k1, (planes,), jnp.float32)
        mean = 0.1 * jax.random.normal(k2, (planes,), jnp.float32)
        var = jax.random.uniform(k3, (planes,), jnp.float32, 0.5, 1.5)
        return (gamma, beta, mean, var)

    return {
        "conv1_w": 0.1 * jax.random.normal(ks[0], (planes, in_planes, 3, 3), jnp.float32),
        "conv2_w": 0.1 * jax.random.normal(ks[1], (planes, planes, 3, 3), jnp.float32),
        "bn1": bn_stats(ks[2]),
        "bn2": bn_stats(ks[3]),
        "sc_w": 0.1 * jax.random.normal(ks[4], (planes, in_planes, 1, 1), jnp.float32),
        "sc_bn": bn_stats(ks[5]),
    }


if __name__ == "__main__":
    key = jax.random.PRNGKey(0)
    N = 2
    configs = [
        # (in_planes, planes, H, W, stride)
        (4, 8, 16, 16, 1),    # projection shortcut (1x1 conv + BN), stride 1
        (8, 8, 16, 16, 1),    # identity shortcut
        (4, 8, 16, 16, 2),    # stride-2 block with projection shortcut
    ]
    for i, (cin, planes, H, W, stride) in enumerate(configs):
        k_x, k_p = jax.random.split(jax.random.fold_in(key, i))
        x = jax.random.normal(k_x, (N, cin, H, W), jnp.float32)
        params = _init_params(k_p, cin, planes)

        out = jax.block_until_ready(basic_block_forward(x, params, stride=stride))
        ref = jax.block_until_ready(_ref_forward(x, params, stride=stride))
        np.testing.assert_allclose(np.asarray(out), np.asarray(ref),
                                   rtol=5e-4, atol=5e-4)
    print("KERNEL_OK")
</pallas_src>

<mosaic_0001>
module attributes {stable_mosaic.version = 11 : i64} {
  func.func @_basic_block_kernel(%arg0: i32, %arg1: memref<1x8x362xf32, #tpu.memory_space<vmem>>, %arg2: memref<8x72xf32, #tpu.memory_space<vmem>>, %arg3: memref<8x1xf32, #tpu.memory_space<vmem>>, %arg4: memref<8x1xf32, #tpu.memory_space<vmem>>, %arg5: memref<8x72xf32, #tpu.memory_space<vmem>>, %arg6: memref<8x1xf32, #tpu.memory_space<vmem>>, %arg7: memref<8x1xf32, #tpu.memory_space<vmem>>, %arg8: memref<8x8xf32, #tpu.memory_space<vmem>>, %arg9: memref<8x1xf32, #tpu.memory_space<vmem>>, %arg10: memref<8x1xf32, #tpu.memory_space<vmem>>, %arg11: memref<1x324xf32, #tpu.memory_space<vmem>>, %arg12: memref<1x8x286xf32, #tpu.memory_space<vmem>>) attributes {dimension_semantics = [#tpu.dimension_semantics<parallel>], iteration_bounds = array<i64: 2>, scalar_prefetch = 0 : i64, scratch_operands = 0 : i64, tpu.core_type = #tpu.core_type<tc>, window_params = [{transform_indices = @transform_0, window_bounds = array<i64: 1, 8, 362>}, {pipeline_mode = #tpu.pipeline_mode<synchronous>, transform_indices = @transform_1, window_bounds = array<i64: 8, 72>}, {pipeline_mode = #tpu.pipeline_mode<synchronous>, transform_indices = @transform_2, window_bounds = array<i64: 8, 1>}, {pipeline_mode = #tpu.pipeline_mode<synchronous>, transform_indices = @transform_3, window_bounds = array<i64: 8, 1>}, {pipeline_mode = #tpu.pipeline_mode<synchronous>, transform_indices = @transform_4, window_bounds = array<i64: 8, 72>}, {pipeline_mode = #tpu.pipeline_mode<synchronous>, transform_indices = @transform_5, window_bounds = array<i64: 8, 1>}, {pipeline_mode = #tpu.pipeline_mode<synchronous>, transform_indices = @transform_6, window_bounds = array<i64: 8, 1>}, {pipeline_mode = #tpu.pipeline_mode<synchronous>, transform_indices = @transform_7, window_bounds = array<i64: 8, 8>}, {pipeline_mode = #tpu.pipeline_mode<synchronous>, transform_indices = @transform_8, window_bounds = array<i64: 8, 1>}, {pipeline_mode = #tpu.pipeline_mode<synchronous>, transform_indices = @transform_9, window_bounds = array<i64: 8, 1>}, {pipeline_mode = #tpu.pipeline_mode<synchronous>, transform_indices = @transform_10, window_bounds = array<i64: 1, 324>}, {transform_indices = @transform_11, window_bounds = array<i64: 1, 8, 286>}]} {
    %c0 = arith.constant 0 : index
    %c0_0 = arith.constant 0 : index
    %0 = vector.load %arg11[%c0, %c0_0] : memref<1x324xf32, #tpu.memory_space<vmem>>, vector<1x324xf32>
    %c0_1 = arith.constant 0 : index
    %c0_2 = arith.constant 0 : index
    %c0_3 = arith.constant 0 : index
    %1 = vector.load %arg1[%c0_1, %c0_2, %c0_3] : memref<1x8x362xf32, #tpu.memory_space<vmem>>, vector<1x8x362xf32>
    %2 = vector.shape_cast %1 : vector<1x8x362xf32> to vector<8x362xf32>
    %3 = vector.extract_strided_slice %2 {offsets = [0, 0], sizes = [8, 324], strides = [1, 1]} : vector<8x362xf32> to vector<8x324xf32>
    %4 = vector.extract_strided_slice %2 {offsets = [0, 1], sizes = [8, 324], strides = [1, 1]} : vector<8x362xf32> to vector<8x324xf32>
    %5 = vector.extract_strided_slice %2 {offsets = [0, 2], sizes = [8, 324], strides = [1, 1]} : vector<8x362xf32> to vector<8x324xf32>
    %6 = vector.extract_strided_slice %2 {offsets = [0, 18], sizes = [8, 324], strides = [1, 1]} : vector<8x362xf32> to vector<8x324xf32>
    %7 = vector.extract_strided_slice %2 {offsets = [0, 19], sizes = [8, 324], strides = [1, 1]} : vector<8x362xf32> to vector<8x324xf32>
    %8 = vector.extract_strided_slice %2 {offsets = [0, 20], sizes = [8, 324], strides = [1, 1]} : vector<8x362xf32> to vector<8x324xf32>
    %9 = vector.extract_strided_slice %2 {offsets = [0, 36], sizes = [8, 324], strides = [1, 1]} : vector<8x362xf32> to vector<8x324xf32>
    %10 = vector.extract_strided_slice %2 {offsets = [0, 37], sizes = [8, 324], strides = [1, 1]} : vector<8x362xf32> to vector<8x324xf32>
    %11 = vector.extract_strided_slice %2 {offsets = [0, 38], sizes = [8, 324], strides = [1, 1]} : vector<8x362xf32> to vector<8x324xf32>
    %12 = tpu.concatenate %3, %4, %5, %6, %7, %8, %9, %10, %11 in 0 : vector<8x324xf32>, vector<8x324xf32>, vector<8x324xf32>, vector<8x324xf32>, vector<8x324xf32>, vector<8x324xf32>, vector<8x324xf32>, vector<8x324xf32>, vector<8x324xf32> -> vector<72x324xf32>
    %c0_4 = arith.constant 0 : index
    %c0_5 = arith.constant 0 : index
    %13 = vector.load %arg2[%c0_4, %c0_5] : memref<8x72xf32, #tpu.memory_space<vmem>>, vector<8x72xf32>
    %cst = arith.constant dense<0.000000e+00> : vector<8x324xf32>
    %14 = tpu.matmul %13, %12, %cst {dimension_numbers = #tpu.dot_dimension_numbers<[1], [0], [0], [1], [0, 0, 1, 1], [], []>} : vector<8x72xf32>, vector<72x324xf32>, vector<8x324xf32> -> vector<8x324xf32>
    %c0_6 = arith.constant 0 : index
    %c0_7 = arith.constant 0 : index
    %15 = vector.load %arg3[%c0_6, %c0_7] : memref<8x1xf32, #tpu.memory_space<vmem>>, vector<8x1xf32>
    %16 = vector.broadcast %15 : vector<8x1xf32> to vector<8x324xf32>
    %17 = arith.mulf %14, %16 : vector<8x324xf32>
    %c0_8 = arith.constant 0 : index
    %c0_9 = arith.constant 0 : index
    %18 = vector.load %arg4[%c0_8, %c0_9] : memref<8x1xf32, #tpu.memory_space<vmem>>, vector<8x1xf32>
    %19 = vector.broadcast %18 : vector<8x1xf32> to vector<8x324xf32>
    %20 = arith.addf %17, %19 : vector<8x324xf32>
    %cst_10 = arith.constant 0.000000e+00 : f32
    %21 = vector.broadcast %cst_10 : f32 to vector<8x324xf32>
    %22 = arith.maximumf %20, %21 : vector<8x324xf32>
    %23 = vector.broadcast %0 : vector<1x324xf32> to vector<8x324xf32>
    %24 = arith.mulf %22, %23 : vector<8x324xf32>
    %25 = vector.extract_strided_slice %24 {offsets = [0, 0], sizes = [8, 286], strides = [1, 1]} : vector<8x324xf32> to vector<8x286xf32>
    %26 = vector.extract_strided_slice %24 {offsets = [0, 1], sizes = [8, 286], strides = [1, 1]} : vector<8x324xf32> to vector<8x286xf32>
    %27 = vector.extract_strided_slice %24 {offsets = [0, 2], sizes = [8, 286], strides = [1, 1]} : vector<8x324xf32> to vector<8x286xf32>
    %28 = vector.extract_strided_slice %24 {offsets = [0, 18], sizes = [8, 286], strides = [1, 1]} : vector<8x324xf32> to vector<8x286xf32>
    %29 = vector.extract_strided_slice %24 {offsets = [0, 19], sizes = [8, 286], strides = [1, 1]} : vector<8x324xf32> to vector<8x286xf32>
    %30 = vector.extract_strided_slice %24 {offsets = [0, 20], sizes = [8, 286], strides = [1, 1]} : vector<8x324xf32> to vector<8x286xf32>
    %31 = vector.extract_strided_slice %24 {offsets = [0, 36], sizes = [8, 286], strides = [1, 1]} : vector<8x324xf32> to vector<8x286xf32>
    %32 = vector.extract_strided_slice %24 {offsets = [0, 37], sizes = [8, 286], strides = [1, 1]} : vector<8x324xf32> to vector<8x286xf32>
    %33 = vector.extract_strided_slice %24 {offsets = [0, 38], sizes = [8, 286], strides = [1, 1]} : vector<8x324xf32> to vector<8x286xf32>
    %34 = tpu.concatenate %25, %26, %27, %28, %29, %30, %31, %32, %33 in 0 : vector<8x286xf32>, vector<8x286xf32>, vector<8x286xf32>, vector<8x286xf32>, vector<8x286xf32>, vector<8x286xf32>, vector<8x286xf32>, vector<8x286xf32>, vector<8x286xf32> -> vector<72x286xf32>
    %c0_11 = arith.constant 0 : index
    %c0_12 = arith.constant 0 : index
    %35 = vector.load %arg5[%c0_11, %c0_12] : memref<8x72xf32, #tpu.memory_space<vmem>>, vector<8x72xf32>
    %cst_13 = arith.constant dense<0.000000e+00> : vector<8x286xf32>
    %36 = tpu.matmul %35, %34, %cst_13 {dimension_numbers = #tpu.dot_dimension_numbers<[1], [0], [0], [1], [0, 0, 1, 1], [], []>} : vector<8x72xf32>, vector<72x286xf32>, vector<8x286xf32> -> vector<8x286xf32>
    %c0_14 = arith.constant 0 : index
    %c0_15 = arith.constant 0 : index
    %37 = vector.load %arg6[%c0_14, %c0_15] : memref<8x1xf32, #tpu.memory_space<vmem>>, vector<8x1xf32>
    %38 = vector.broadcast %37 : vector<8x1xf32> to vector<8x286xf32>
    %39 = arith.mulf %36, %38 : vector<8x286xf32>
    %c0_16 = arith.constant 0 : index
    %c0_17 = arith.constant 0 : index
    %40 = vector.load %arg7[%c0_16, %c0_17] : memref<8x1xf32, #tpu.memory_space<vmem>>, vector<8x1xf32>
    %41 = vector.broadcast %40 : vector<8x1xf32> to vector<8x286xf32>
    %42 = arith.addf %39, %41 : vector<8x286xf32>
    %43 = vector.extract_strided_slice %2 {offsets = [0, 38], sizes = [8, 286], strides = [1, 1]} : vector<8x362xf32> to vector<8x286xf32>
    %c0_18 = arith.constant 0 : index
    %c0_19 = arith.constant 0 : index
    %44 = vector.load %arg8[%c0_18, %c0_19] : memref<8x8xf32, #tpu.memory_space<vmem>>, vector<8x8xf32>
    %cst_20 = arith.constant dense<0.000000e+00> : vector<8x286xf32>
    %45 = tpu.matmul %44, %43, %cst_20 {dimension_numbers = #tpu.dot_dimension_numbers<[1], [0], [0], [1], [0, 0, 1, 1], [], []>} : vector<8x8xf32>, vector<8x286xf32>, vector<8x286xf32> -> vector<8x286xf32>
    %c0_21 = arith.constant 0 : index
    %c0_22 = arith.constant 0 : index
    %46 = vector.load %arg9[%c0_21, %c0_22] : memref<8x1xf32, #tpu.memory_space<vmem>>, vector<8x1xf32>
    %47 = vector.broadcast %46 : vector<8x1xf32> to vector<8x286xf32>
    %48 = arith.mulf %45, %47 : vector<8x286xf32>
    %c0_23 = arith.constant 0 : index
    %c0_24 = arith.constant 0 : index
    %49 = vector.load %arg10[%c0_23, %c0_24] : memref<8x1xf32, #tpu.memory_space<vmem>>, vector<8x1xf32>
    %50 = vector.broadcast %49 : vector<8x1xf32> to vector<8x286xf32>
    %51 = arith.addf %48, %50 : vector<8x286xf32>
    %52 = arith.addf %42, %51 : vector<8x286xf32>
    %cst_25 = arith.constant 0.000000e+00 : f32
    %53 = vector.broadcast %cst_25 : f32 to vector<8x286xf32>
    %54 = arith.maximumf %52, %53 : vector<8x286xf32>
    %c0_26 = arith.constant 0 : index
    %c0_27 = arith.constant 0 : index
    %c0_28 = arith.constant 0 : index
    %55 = vector.load %arg12[%c0_26, %c0_27, %c0_28] : memref<1x8x286xf32, #tpu.memory_space<vmem>>, vector<1x8x286xf32>
    %56 = vector.shape_cast %55 : vector<1x8x286xf32> to vector<8x286xf32>
    %57 = vector.shape_cast %54 : vector<8x286xf32> to vector<1x8x286xf32>
    tpu.vector_store %arg12[%c0_26, %c0_27, %c0_28], %57 {strides = array<i32>} : memref<1x8x286xf32, #tpu.memory_space<vmem>>, vector<1x8x286xf32>,
    return
  }
  func.func @transform_0(%arg0: i32) -> (i32, i32, i32) {
    %c0_i32 = arith.constant 0 : i32
    %c0_i32_0 = arith.constant 0 : i32
    %c0_i32_1 = arith.constant 0 : i32
    return %arg0, %c0_i32, %c0_i32_0 : i32, i32, i32
  }
  func.func @transform_1(%arg0: i32) -> (i32, i32) {
    %c0_i32 = arith.constant 0 : i32
    %c0_i32_0 = arith.constant 0 : i32
    %c0_i32_1 = arith.constant 0 : i32
    return %c0_i32, %c0_i32_0 : i32, i32
  }
  func.func @transform_2(%arg0: i32) -> (i32, i32) {
    %c0_i32 = arith.constant 0 : i32
    %c0_i32_0 = arith.constant 0 : i32
    %c0_i32_1 = arith.constant 0 : i32
    return %c0_i32, %c0_i32_0 : i32, i32
  }
  func.func @transform_3(%arg0: i32) -> (i32, i32) {
    %c0_i32 = arith.constant 0 : i32
    %c0_i32_0 = arith.constant 0 : i32
    %c0_i32_1 = arith.constant 0 : i32
    return %c0_i32, %c0_i32_0 : i32, i32
  }
  func.func @transform_4(%arg0: i32) -> (i32, i32) {
    %c0_i32 = arith.constant 0 : i32
    %c0_i32_0 = arith.constant 0 : i32
    %c0_i32_1 = arith.constant 0 : i32
    return %c0_i32, %c0_i32_0 : i32, i32
  }
  func.func @transform_5(%arg0: i32) -> (i32, i32) {
    %c0_i32 = arith.constant 0 : i32
    %c0_i32_0 = arith.constant 0 : i32
    %c0_i32_1 = arith.constant 0 : i32
    return %c0_i32, %c0_i32_0 : i32, i32
  }
  func.func @transform_6(%arg0: i32) -> (i32, i32) {
    %c0_i32 = arith.constant 0 : i32
    %c0_i32_0 = arith.constant 0 : i32
    %c0_i32_1 = arith.constant 0 : i32
    return %c0_i32, %c0_i32_0 : i32, i32
  }
  func.func @transform_7(%arg0: i32) -> (i32, i32) {
    %c0_i32 = arith.constant 0 : i32
    %c0_i32_0 = arith.constant 0 : i32
    %c0_i32_1 = arith.constant 0 : i32
    return %c0_i32, %c0_i32_0 : i32, i32
  }
  func.func @transform_8(%arg0: i32) -> (i32, i32) {
    %c0_i32 = arith.constant 0 : i32
    %c0_i32_0 = arith.constant 0 : i32
    %c0_i32_1 = arith.constant 0 : i32
    return %c0_i32, %c0_i32_0 : i32, i32
  }
  func.func @transform_9(%arg0: i32) -> (i32, i32) {
    %c0_i32 = arith.constant 0 : i32
    %c0_i32_0 = arith.constant 0 : i32
    %c0_i32_1 = arith.constant 0 : i32
    return %c0_i32, %c0_i32_0 : i32, i32
  }
  func.func @transform_10(%arg0: i32) -> (i32, i32) {
    %c0_i32 = arith.constant 0 : i32
    %c0_i32_0 = arith.constant 0 : i32
    %c0_i32_1 = arith.constant 0 : i32
    return %c0_i32, %c0_i32_0 : i32, i32
  }
  func.func @transform_11(%arg0: i32) -> (i32, i32, i32) {
    %c0_i32 = arith.constant 0 : i32
    %c0_i32_0 = arith.constant 0 : i32
    %c0_i32_1 = arith.constant 0 : i32
    return %arg0, %c0_i32, %c0_i32_0 : i32, i32, i32
  }
}

</mosaic_0001>

<llo_original>
// kernel: tpu_custom_call.1
$region0: #{tpu_custom_call.1}
  #allocation0 [shape = 'u32[]', space=smem, size = 0x4, offset = 0x4, fixed_abs, tag = 'smem constant byte address 0x4 - core index']
  #allocation1 [shape = 'u32[144,128]{1,0:T(1,128)}', space=vmem, size = 0x12000, scoped, tag = 'internal scratch']
  %s0 = inlined_call_operand.vmem [shape: f32[2,8,362], index: 0, kind: input, shape index: {}]
  %s1 = inlined_call_operand.vmem [shape: f32[8,72], index: 1, kind: input, shape index: {}]
  %s2 = inlined_call_operand.vmem [shape: f32[8,1], index: 2, kind: input, shape index: {}]
  %s3 = inlined_call_operand.vmem [shape: f32[8,1], index: 3, kind: input, shape index: {}]
  %s4 = inlined_call_operand.vmem [shape: f32[8,72], index: 4, kind: input, shape index: {}]
  %s5 = inlined_call_operand.vmem [shape: f32[8,1], index: 5, kind: input, shape index: {}]
  %s6 = inlined_call_operand.vmem [shape: f32[8,1], index: 6, kind: input, shape index: {}]
  %s7 = inlined_call_operand.vmem [shape: f32[8,8], index: 7, kind: input, shape index: {}]
  %s8 = inlined_call_operand.vmem [shape: f32[8,1], index: 8, kind: input, shape index: {}]
  %s9 = inlined_call_operand.vmem [shape: f32[8,1], index: 9, kind: input, shape index: {}]
  %s10 = inlined_call_operand.vmem [shape: f32[1,324], index: 10, kind: input, shape index: {}]
  %s11 = inlined_call_operand.hbm [shape: f32[2,8,286], index: 11, kind: output, shape index: {}]
  %s12 = sld [smem:[#allocation0]]
  $region77: #{tpu_custom_call.1} parent=0
    _
  %s14 = ssub.s32 1, %s12
  %s15 = scalar_select 0, %s14, %s12
  $region1: #{tpu_custom_call.1} parent=0
    #allocation2 [shape = 'u8[24576]{0}', space=vmem, size = 0x6000, scoped, tag = 'output window, operand 0']
    #allocation3 [shape = 's32[2]{0}', space=sflag, size = 0x8, scoped, tag = 'scoped memory for tpu_custom_call.1']
    %16 = vsyncpa [#allocation3], 0
    %s17 = scalar_lea.sflag [#allocation3], 1
    %18 = vsyncpa %s17, 0
    loop: start=0, step=1, limit=4
    $region2: #{tpu_custom_call.1} parent=1 // loop_pre_header
      _
    $region3: #{tpu_custom_call.1} parent=1 // loop_header
      %s20 = sphi 0, %s24
      %p21 = scmp.ge.s32.totalorder %s20, 4
      %s30 = sphi 0, %s32
      %s33 = sphi 0, %s30
      %s34 = sphi 0, %s33
      %s50 = sphi 0, %s34
      %s54 = sphi 0, %s54
      %s56 = sphi 0, %s54
      %s57 = sphi 0, %s56
      %s71 = sphi 0, %s57
      %s75 = sphi 0, %s75
      %s77 = sphi 0, %s75
      %s78 = sphi 0, %s77
      %s92 = sphi 0, %s78
      %s96 = sphi 0, %s96
      %s98 = sphi 0, %s96
      %s99 = sphi 0, %s98
      %s113 = sphi 0, %s99
      %s117 = sphi 0, %s117
      %s119 = sphi 0, %s117
      %s120 = sphi 0, %s119
      %s134 = sphi 0, %s120
      %s138 = sphi 0, %s138
      %s140 = sphi 0, %s138
      %s141 = sphi 0, %s140
      %s155 = sphi 0, %s141
      %s159 = sphi 0, %s159
      %s161 = sphi 0, %s159
      %s162 = sphi 0, %s161
      %s176 = sphi 0, %s162
      %s180 = sphi 0, %s180
      %s182 = sphi 0, %s180
      %s183 = sphi 0, %s182
      %s197 = sphi 0, %s183
      %s201 = sphi 0, %s201
      %s203 = sphi 0, %s201
      %s204 = sphi 0, %s203
      %s218 = sphi 0, %s204
      %s222 = sphi 0, %s222
      %s224 = sphi 0, %s222
      %s225 = sphi 0, %s224
      %s239 = sphi 0, %s225
      %s243 = sphi 0, %s243
      %s245 = sphi 0, %s243
      %s246 = sphi 0, %s245
      %s260 = sphi 0, %s246
      %s266 = sphi 0, %s268
      %s269 = sphi 0, %s266
      %s270 = sphi 0, %s269
      %s286 = sphi 0, %s270
    $region4: #{tpu_custom_call.1} parent=1 // loop_header_branch
      %23 = sbr.rel (%p21) target = $region8
    $region5: #{tpu_custom_call.1} parent=1 // loop_body
      %s25 = ssub.s32 %s20, 1
      %s26 = ssub.s32 %s20, 2
      %s27 = sadd.s32 %s20, 1
      %s28 = ssub.s32 %s20, %s27
      %p29 = scmp.eq.s32.totalorder %s28, 0
      %s31 = sadd.s32 %s30, 1
      %s32 = scalar_select %p29, %s30, %s31
      %p35 = pneg %p29
      %p36 = scmp.eq.s32.totalorder %s20, 1
      %p37 = por %p35, %p36
      %p38 = scmp.ne.s32.totalorder %s30, %s33
      %p39 = scmp.eq.s32.totalorder %s20, 0
      %p40 = por %p38, %p39
      %p41 = scmp.ne.s32.totalorder %s30, %s33
      %p42 = scmp.eq.s32.totalorder %s25, 1
      %p43 = por %p41, %p42
      %p44 = scmp.ne.s32.totalorder %s33, %s34
      %p45 = scmp.eq.s32.totalorder %s25, 0
      %p46 = por %p44, %p45
      %p47 = scmp.ne.s32.totalorder %s33, %s34
      %p48 = scmp.eq.s32.totalorder %s26, 1
      %p49 = por %p47, %p48
      %p51 = scmp.ne.s32.totalorder %s34, %s50
      %p52 = scmp.eq.s32.totalorder %s26, 0
      %p53 = por %p51, %p52
      %s55 = sadd.s32 %s54, 1
      %p58 = scmp.eq.s32.totalorder %s20, 1
      %p59 = scmp.ne.s32.totalorder %s54, %s56
      %p60 = scmp.eq.s32.totalorder %s20, 0
      %p61 = por %p59, %p60
      %p62 = scmp.ne.s32.totalorder %s54, %s56
      %p63 = scmp.eq.s32.totalorder %s25, 1
      %p64 = por %p62, %p63
      %p65 = scmp.ne.s32.totalorder %s56, %s57
      %p66 = scmp.eq.s32.totalorder %s25, 0
      %p67 = por %p65, %p66
      %p68 = scmp.ne.s32.totalorder %s56, %s57
      %p69 = scmp.eq.s32.totalorder %s26, 1
      %p70 = por %p68, %p69
      %p72 = scmp.ne.s32.totalorder %s57, %s71
      %p73 = scmp.eq.s32.totalorder %s26, 0
      %p74 = por %p72, %p73
      %s76 = sadd.s32 %s75, 1
      %p79 = scmp.eq.s32.totalorder %s20, 1
      %p80 = scmp.ne.s32.totalorder %s75, %s77
      %p81 = scmp.eq.s32.totalorder %s20, 0
      %p82 = por %p80, %p81
      %p83 = scmp.ne.s32.totalorder %s75, %s77
      %p84 = scmp.eq.s32.totalorder %s25, 1
      %p85 = por %p83, %p84
      %p86 = scmp.ne.s32.totalorder %s77, %s78
      %p87 = scmp.eq.s32.totalorder %s25, 0
      %p88 = por %p86, %p87
      %p89 = scmp.ne.s32.totalorder %s77, %s78
      %p90 = scmp.eq.s32.totalorder %s26, 1
      %p91 = por %p89, %p90
      %p93 = scmp.ne.s32.totalorder %s78, %s92
      %p94 = scmp.eq.s32.totalorder %s26, 0
      %p95 = por %p93, %p94
      %s97 = sadd.s32 %s96, 1
      %p100 = scmp.eq.s32.totalorder %s20, 1
      %p101 = scmp.ne.s32.totalorder %s96, %s98
      %p102 = scmp.eq.s32.totalorder %s20, 0
      %p103 = por %p101, %p102
      %p104 = scmp.ne.s32.totalorder %s96, %s98
      %p105 = scmp.eq.s32.totalorder %s25, 1
      %p106 = por %p104, %p105
      %p107 = scmp.ne.s32.totalorder %s98, %s99
      %p108 = scmp.eq.s32.totalorder %s25, 0
      %p109 = por %p107, %p108
      %p110 = scmp.ne.s32.totalorder %s98, %s99
      %p111 = scmp.eq.s32.totalorder %s26, 1
      %p112 = por %p110, %p111
      %p114 = scmp.ne.s32.totalorder %s99, %s113
      %p115 = scmp.eq.s32.totalorder %s26, 0
      %p116 = por %p114, %p115
      %s118 = sadd.s32 %s117, 1
      %p121 = scmp.eq.s32.totalorder %s20, 1
      %p122 = scmp.ne.s32.totalorder %s117, %s119
      %p123 = scmp.eq.s32.totalorder %s20, 0
      %p124 = por %p122, %p123
      %p125 = scmp.ne.s32.totalorder %s117, %s119
      %p126 = scmp.eq.s32.totalorder %s25, 1
      %p127 = por %p125, %p126
      %p128 = scmp.ne.s32.totalorder %s119, %s120
      %p129 = scmp.eq.s32.totalorder %s25, 0
      %p130 = por %p128, %p129
      %p131 = scmp.ne.s32.totalorder %s119, %s120
      %p132 = scmp.eq.s32.totalorder %s26, 1
      %p133 = por %p131, %p132
      %p135 = scmp.ne.s32.totalorder %s120, %s134
      %p136 = scmp.eq.s32.totalorder %s26, 0
      %p137 = por %p135, %p136
      %s139 = sadd.s32 %s138, 1
      %p142 = scmp.eq.s32.totalorder %s20, 1
      %p143 = scmp.ne.s32.totalorder %s138, %s140
      %p144 = scmp.eq.s32.totalorder %s20, 0
      %p145 = por %p143, %p144
      %p146 = scmp.ne.s32.totalorder %s138, %s140
      %p147 = scmp.eq.s32.totalorder %s25, 1
      %p148 = por %p146, %p147
      %p149 = scmp.ne.s32.totalorder %s140, %s141
      %p150 = scmp.eq.s32.totalorder %s25, 0
      %p151 = por %p149, %p150
      %p152 = scmp.ne.s32.totalorder %s140, %s141
      %p153 = scmp.eq.s32.totalorder %s26, 1
      %p154 = por %p152, %p153
      %p156 = scmp.ne.s32.totalorder %s141, %s155
      %p157 = scmp.eq.s32.totalorder %s26, 0
      %p158 = por %p156, %p157
      %s160 = sadd.s32 %s159, 1
      %p163 = scmp.eq.s32.totalorder %s20, 1
      %p164 = scmp.ne.s32.totalorder %s159, %s161
      %p165 = scmp.eq.s32.totalorder %s20, 0
      %p166 = por %p164, %p165
      %p167 = scmp.ne.s32.totalorder %s159, %s161
      %p168 = scmp.eq.s32.totalorder %s25, 1
      %p169 = por %p167, %p168
      %p170 = scmp.ne.s32.totalorder %s161, %s162
      %p171 = scmp.eq.s32.totalorder %s25, 0
      %p172 = por %p170, %p171
      %p173 = scmp.ne.s32.totalorder %s161, %s162
      %p174 = scmp.eq.s32.totalorder %s26, 1
      %p175 = por %p173, %p174
      %p177 = scmp.ne.s32.totalorder %s162, %s176
      %p178 = scmp.eq.s32.totalorder %s26, 0
      %p179 = por %p177, %p178
      %s181 = sadd.s32 %s180, 1
      %p184 = scmp.eq.s32.totalorder %s20, 1
      %p185 = scmp.ne.s32.totalorder %s180, %s182
      %p186 = scmp.eq.s32.totalorder %s20, 0
      %p187 = por %p185, %p186
      %p188 = scmp.ne.s32.totalorder %s180, %s182
      %p189 = scmp.eq.s32.totalorder %s25, 1
      %p190 = por %p188, %p189
      %p191 = scmp.ne.s32.totalorder %s182, %s183
      %p192 = scmp.eq.s32.totalorder %s25, 0
      %p193 = por %p191, %p192
      %p194 = scmp.ne.s32.totalorder %s182, %s183
      %p195 = scmp.eq.s32.totalorder %s26, 1
      %p196 = por %p194, %p195
      %p198 = scmp.ne.s32.totalorder %s183, %s197
      %p199 = scmp.eq.s32.totalorder %s26, 0
      %p200 = por %p198, %p199
      %s202 = sadd.s32 %s201, 1
      %p205 = scmp.eq.s32.totalorder %s20, 1
      %p206 = scmp.ne.s32.totalorder %s201, %s203
      %p207 = scmp.eq.s32.totalorder %s20, 0
      %p208 = por %p206, %p207
      %p209 = scmp.ne.s32.totalorder %s201, %s203
      %p210 = scmp.eq.s32.totalorder %s25, 1
      %p211 = por %p209, %p210
      %p212 = scmp.ne.s32.totalorder %s203, %s204
      %p213 = scmp.eq.s32.totalorder %s25, 0
      %p214 = por %p212, %p213
      %p215 = scmp.ne.s32.totalorder %s203, %s204
      %p216 = scmp.eq.s32.totalorder %s26, 1
      %p217 = por %p215, %p216
      %p219 = scmp.ne.s32.totalorder %s204, %s218
      %p220 = scmp.eq.s32.totalorder %s26, 0
      %p221 = por %p219, %p220
      %s223 = sadd.s32 %s222, 1
      %p226 = scmp.eq.s32.totalorder %s20, 1
      %p227 = scmp.ne.s32.totalorder %s222, %s224
      %p228 = scmp.eq.s32.totalorder %s20, 0
      %p229 = por %p227, %p228
      %p230 = scmp.ne.s32.totalorder %s222, %s224
      %p231 = scmp.eq.s32.totalorder %s25, 1
      %p232 = por %p230, %p231
      %p233 = scmp.ne.s32.totalorder %s224, %s225
      %p234 = scmp.eq.s32.totalorder %s25, 0
      %p235 = por %p233, %p234
      %p236 = scmp.ne.s32.totalorder %s224, %s225
      %p237 = scmp.eq.s32.totalorder %s26, 1
      %p238 = por %p236, %p237
      %p240 = scmp.ne.s32.totalorder %s225, %s239
      %p241 = scmp.eq.s32.totalorder %s26, 0
      %p242 = por %p240, %p241
      %s244 = sadd.s32 %s243, 1
      %p247 = scmp.eq.s32.totalorder %s20, 1
      %p248 = scmp.ne.s32.totalorder %s243, %s245
      %p249 = scmp.eq.s32.totalorder %s20, 0
      %p250 = por %p248, %p249
      %p251 = scmp.ne.s32.totalorder %s243, %s245
      %p252 = scmp.eq.s32.totalorder %s25, 1
      %p253 = por %p251, %p252
      %p254 = scmp.ne.s32.totalorder %s245, %s246
      %p255 = scmp.eq.s32.totalorder %s25, 0
      %p256 = por %p254, %p255
      %p257 = scmp.ne.s32.totalorder %s245, %s246
      %p258 = scmp.eq.s32.totalorder %s26, 1
      %p259 = por %p257, %p258
      %p261 = scmp.ne.s32.totalorder %s246, %s260
      %p262 = scmp.eq.s32.totalorder %s26, 0
      %p263 = por %p261, %p262
      %s264 = ssub.s32 %s20, %s27
      %p265 = scmp.eq.s32.totalorder %s264, 0
      %s267 = sadd.s32 %s266, 1
      %s268 = scalar_select %p265, %s266, %s267
      %p271 = pneg %p265
      %p272 = scmp.eq.s32.totalorder %s20, 1
      %p273 = por %p271, %p272
      %p274 = scmp.ne.s32.totalorder %s266, %s269
      %p275 = scmp.eq.s32.totalorder %s20, 0
      %p276 = por %p274, %p275
      %p277 = scmp.ne.s32.totalorder %s266, %s269
      %p278 = scmp.eq.s32.totalorder %s25, 1
      %p279 = por %p277, %p278
      %p280 = scmp.ne.s32.totalorder %s269, %s270
      %p281 = scmp.eq.s32.totalorder %s25, 0
      %p282 = por %p280, %p281
      %p283 = scmp.ne.s32.totalorder %s269, %s270
      %p284 = scmp.eq.s32.totalorder %s26, 1
      %p285 = por %p283, %p284
      %p287 = scmp.ne.s32.totalorder %s270, %s286
      %p288 = scmp.eq.s32.totalorder %s26, 0
      %p289 = por %p287, %p288
      %p290 = scmp.le.s32.totalorder 1, %s20
      %p291 = scmp.lt.s32.totalorder %s20, 3
      %p292 = pnand %p290, %p291
      %p293 = pneg %p292
      // Predicated region
      $region9: #{tpu_custom_call.1} parent=5 // pred_check
        _
      $region10: #{tpu_custom_call.1} parent=5 // pred_check_branch
        %295 = sbr.rel (%p292) target = $region12
      $region11: #{tpu_custom_call.1} parent=5 // pred_region
        %s296 = ssub.s32 %s20, 1
        // Predicated region
        $region13: #{tpu_custom_call.1} parent=11 // pred_check
          %p297 = pneg %p67
        $region14: #{tpu_custom_call.1} parent=11 // pred_check_branch
          %299 = sbr.rel (%p297) target = $region16
        $region15: #{tpu_custom_call.1} parent=11 // pred_region
          _
        $region16: #{tpu_custom_call.1} parent=11 // pred_fallthru
          _
        // Predicated region
        $region17: #{tpu_custom_call.1} parent=11 // pred_check
          %p300 = pneg %p88
        $region18: #{tpu_custom_call.1} parent=11 // pred_check_branch
          %302 = sbr.rel (%p300) target = $region20
        $region19: #{tpu_custom_call.1} parent=11 // pred_region
          _
        $region20: #{tpu_custom_call.1} parent=11 // pred_fallthru
          _
        // Predicated region
        $region21: #{tpu_custom_call.1} parent=11 // pred_check
          %p303 = pneg %p109
        $region22: #{tpu_custom_call.1} parent=11 // pred_check_branch
          %305 = sbr.rel (%p303) target = $region24
        $region23: #{tpu_custom_call.1} parent=11 // pred_region
          _
        $region24: #{tpu_custom_call.1} parent=11 // pred_fallthru
          _
        // Predicated region
        $region25: #{tpu_custom_call.1} parent=11 // pred_check
          %p306 = pneg %p130
        $region26: #{tpu_custom_call.1} parent=11 // pred_check_branch
          %308 = sbr.rel (%p306) target = $region28
        $region27: #{tpu_custom_call.1} parent=11 // pred_region
          _
        $region28: #{tpu_custom_call.1} parent=11 // pred_fallthru
          _
        // Predicated region
        $region29: #{tpu_custom_call.1} parent=11 // pred_check
          %p309 = pneg %p151
        $region30: #{tpu_custom_call.1} parent=11 // pred_check_branch
          %311 = sbr.rel (%p309) target = $region32
        $region31: #{tpu_custom_call.1} parent=11 // pred_region
          _
        $region32: #{tpu_custom_call.1} parent=11 // pred_fallthru
          _
        // Predicated region
        $region33: #{tpu_custom_call.1} parent=11 // pred_check
          %p312 = pneg %p172
        $region34: #{tpu_custom_call.1} parent=11 // pred_check_branch
          %314 = sbr.rel (%p312) target = $region36
        $region35: #{tpu_custom_call.1} parent=11 // pred_region
          _
        $region36: #{tpu_custom_call.1} parent=11 // pred_fallthru
          _
        // Predicated region
        $region37: #{tpu_custom_call.1} parent=11 // pred_check
          %p315 = pneg %p193
        $region38: #{tpu_custom_call.1} parent=11 // pred_check_branch
          %317 = sbr.rel (%p315) target = $region40
        $region39: #{tpu_custom_call.1} parent=11 // pred_region
          _
        $region40: #{tpu_custom_call.1} parent=11 // pred_fallthru
          _
        // Predicated region
        $region41: #{tpu_custom_call.1} parent=11 // pred_check
          %p318 = pneg %p214
        $region42: #{tpu_custom_call.1} parent=11 // pred_check_branch
          %320 = sbr.rel (%p318) target = $region44
        $region43: #{tpu_custom_call.1} parent=11 // pred_region
          _
        $region44: #{tpu_custom_call.1} parent=11 // pred_fallthru
          _
        // Predicated region
        $region45: #{tpu_custom_call.1} parent=11 // pred_check
          %p321 = pneg %p235
        $region46: #{tpu_custom_call.1} parent=11 // pred_check_branch
          %323 = sbr.rel (%p321) target = $region48
        $region47: #{tpu_custom_call.1} parent=11 // pred_region
          _
        $region48: #{tpu_custom_call.1} parent=11 // pred_fallthru
          _
        // Predicated region
        $region49: #{tpu_custom_call.1} parent=11 // pred_check
          %p324 = pneg %p256
        $region50: #{tpu_custom_call.1} parent=11 // pred_check_branch
          %326 = sbr.rel (%p324) target = $region52
        $region51: #{tpu_custom_call.1} parent=11 // pred_region
          _
        $region52: #{tpu_custom_call.1} parent=11 // pred_fallthru
          _
      $region12: #{tpu_custom_call.1} parent=5 // pred_fallthru
        _
      %p327 = scmp.lt.s32.totalorder %s20, 2
      // Predicated region
      $region53: #{tpu_custom_call.1} parent=5 // pred_check
        %p328 = pneg %p327
      $region54: #{tpu_custom_call.1} parent=5 // pred_check_branch
        %330 = sbr.rel (%p328) target = $region56
      $region55: #{tpu_custom_call.1} parent=5 // pred_region
        // Predicated region
        $region57: #{tpu_custom_call.1} parent=55 // pred_check
          %p331 = pneg %p40
        $region58: #{tpu_custom_call.1} parent=55 // pred_check_branch
          %333 = sbr.rel (%p331) target = $region60
        $region59: #{tpu_custom_call.1} parent=55 // pred_region
          %p334 = scmp.lt.s32.totalorder %s20, 1
          %s335 = scalar_select %p334, %s20, 1
          %s336 = smul.addr %s335, 3
          %s337 = smul.addr %s336, 8
          %s338 = scalar_lea.vmem %s0, %s337
        $region60: #{tpu_custom_call.1} parent=55 // pred_fallthru
          _
      $region56: #{tpu_custom_call.1} parent=5 // pred_fallthru
        _
      %p339 = scmp.le.s32.totalorder 1, %s20
      %p340 = scmp.lt.s32.totalorder %s20, 3
      %p341 = pnand %p339, %p340
      %p342 = pneg %p341
      // Predicated region
      $region61: #{tpu_custom_call.1} parent=5 // pred_check
        _
      $region62: #{tpu_custom_call.1} parent=5 // pred_check_branch
        %344 = sbr.rel (%p341) target = $region64
      $region63: #{tpu_custom_call.1} parent=5 // pred_region
        %s345 = ssub.s32 %s20, 1
        %p346 = scmp.lt.s32.totalorder %s25, 1
        %s347 = scalar_select %p346, %s25, 1
        %s348 = smul.addr %s347, 3
        %s349 = smul.addr %s348, 8
        %s350 = scalar_lea.vmem %s0, %s349
        %p351 = pneg %p46
        %p352 = pneg %p43
        %p353 = pneg %p67
        %p354 = pneg %p64
        %p355 = pneg %p88
        %p356 = pneg %p85
        %p357 = pneg %p109
        %p358 = pneg %p106
        %p359 = pneg %p130
        %p360 = pneg %p127
        %p361 = pneg %p151
        %p362 = pneg %p148
        %p363 = pneg %p172
        %p364 = pneg %p169
        %p365 = pneg %p193
        %p366 = pneg %p190
        %p367 = pneg %p214
        %p368 = pneg %p211
        %p369 = pneg %p235
        %p370 = pneg %p232
        %p371 = pneg %p256
        %p372 = pneg %p253
        %p373 = pneg %p282
        %p374 = pneg %p279
        %s375 = sand.u32 %s269, 1
        %s376 = scalar_lea.sflag [#allocation3], %s375
        %s377 = sand.u32 %s269, 1
        %s378 = smul.addr %s377, 24
        %s379 = scalar_lea.vmem [#allocation2], %s378
        %p380 = scmp.lt.s32.totalorder %s25, 1
        %s381 = scalar_select %p380, %s25, 1
        %s382 = smul.addr %s381, 3
        %s383 = smul.addr %s382, 8
        %s384 = scalar_lea.vmem %s0, %s383
        %v385 = vld [vmem:[%s10] sm:$0x7]
        %v386 = vld [vmem:[%s384] sm:$0xff]
        %v387 = vld [vmem:[%s384 + $0x8] sm:$0xff]
        %v388 = vld [vmem:[%s384 + $0x10] sm:$0xff]
        %392 = vrot.lane.b32.xlu0 %v386, 127
        %v393 = vpop.permute.xlu0 %392
        %394 = vrot.lane.b32.xlu0 %v387, 127
        %v395 = vpop.permute.xlu0 %394
        %396 = vrot.lane.b32.xlu0 %v388, 127
        %v397 = vpop.permute.xlu0 %396
        %vm398 = vcmask 1039360
        %v399 = vsel %vm398, %v393, %v395
        %v400 = vsel %vm398, %v395, %v397
        %404 = vrot.lane.b32.xlu0 %v386, 126
        %v405 = vpop.permute.xlu0 %404
        %406 = vrot.lane.b32.xlu0 %v387, 126
        %v407 = vpop.permute.xlu0 %406
        %408 = vrot.lane.b32.xlu0 %v388, 126
        %v409 = vpop.permute.xlu0 %408
        %vm410 = vcmask 1031168
        %v411 = vsel %vm410, %v405, %v407
        %v412 = vsel %vm410, %v407, %v409
        %416 = vrot.lane.b32.xlu0 %v386, 110
        %v417 = vpop.permute.xlu0 %416
        %418 = vrot.lane.b32.xlu0 %v387, 110
        %v419 = vpop.permute.xlu0 %418
        %420 = vrot.lane.b32.xlu0 %v388, 110
        %v421 = vpop.permute.xlu0 %420
        %vm422 = vcmask 900096
        %v423 = vsel %vm422, %v417, %v419
        %v424 = vsel %vm422, %v419, %v421
        %428 = vrot.lane.b32.xlu0 %v386, 109
        %v429 = vpop.permute.xlu0 %428
        %430 = vrot.lane.b32.xlu0 %v387, 109
        %v431 = vpop.permute.xlu0 %430
        %432 = vrot.lane.b32.xlu0 %v388, 109
        %v433 = vpop.permute.xlu0 %432
        %vm434 = vcmask 891904
        %v435 = vsel %vm434, %v429, %v431
        %v436 = vsel %vm434, %v431, %v433
        %440 = vrot.lane.b32.xlu0 %v386, 108
        %v441 = vpop.permute.xlu0 %440
        %442 = vrot.lane.b32.xlu0 %v387, 108
        %v443 = vpop.permute.xlu0 %442
        %444 = vrot.lane.b32.xlu0 %v388, 108
        %v445 = vpop.permute.xlu0 %444
        %vm446 = vcmask 883712
        %v447 = vsel %vm446, %v441, %v443
        %v448 = vsel %vm446, %v443, %v445
        %452 = vrot.lane.b32.xlu0 %v386, 92
        %v453 = vpop.permute.xlu0 %452
        %454 = vrot.lane.b32.xlu0 %v387, 92
        %v455 = vpop.permute.xlu0 %454
        %456 = vrot.lane.b32.xlu0 %v388, 92
        %v457 = vpop.permute.xlu0 %456
        %vm458 = vcmask 752640
        %v459 = vsel %vm458, %v453, %v455
        %v460 = vsel %vm458, %v455, %v457
        %464 = vrot.lane.b32.xlu0 %v386, 91
        %v465 = vpop.permute.xlu0 %464
        %466 = vrot.lane.b32.xlu0 %v387, 91
        %v467 = vpop.permute.xlu0 %466
        %468 = vrot.lane.b32.xlu0 %v388, 91
        %v469 = vpop.permute.xlu0 %468
        %vm470 = vcmask 744448
        %v471 = vsel %vm470, %v465, %v467
        %v472 = vsel %vm470, %v467, %v469
        %476 = vrot.lane.b32.xlu0 %v386, 90
        %v477 = vpop.permute.xlu0 %476
        %478 = vrot.lane.b32.xlu0 %v387, 90
        %v479 = vpop.permute.xlu0 %478
        %480 = vrot.lane.b32.xlu0 %v388, 90
        %v481 = vpop.permute.xlu0 %480
        %vm482 = vcmask 736256
        %v483 = vsel %vm482, %v477, %v479
        %v484 = vsel %vm482, %v479, %v481
        %v488 = vld [vmem:[%s1] sm:$0xff]
        %vm489 = vcmask 588800
        %v491 = vsel %vm489, %v488, 0
        %493 = vmatprep.subr.mxu0 %v387
        %494 = vmatpush1.msra.mxu0 %v386
        %495 = vmatprep.subr.mxu0 %v400
        %496 = vmatpush1.msra.mxu0 %v399
        %497 = vmatprep.subr.mxu0 %v412
        %498 = vmatpush1.msra.mxu0 %v411
        %499 = vmatprep.subr.mxu0 %v424
        %500 = vmatpush1.msra.mxu0 %v423
        %501 = vmatprep.subr.mxu0 %v436
        %502 = vmatpush1.msra.mxu0 %v435
        %503 = vmatprep.subr.mxu0 %v448
        %504 = vmatpush1.msra.mxu0 %v447
        %505 = vmatprep.subr.mxu0 %v460
        %506 = vmatpush1.msra.mxu0 %v459
        %507 = vmatprep.subr.mxu0 %v472
        %508 = vmatpush1.msra.mxu0 %v471
        %509 = vmatprep.subr.mxu0 %v484
        %510 = vmatpush1.msra.mxu0 %v483
        %511 = vmatprep.subr.mxu0 0.0
        %512 = vmatpush1.msra.mxu0 0.0
        %513 = vmatprep.subr.mxu0 0.0
        %514 = vmatpush1.msra.mxu0 0.0
        %515 = vmatprep.subr.mxu0 0.0
        %516 = vmatpush1.msra.mxu0 0.0
        %517 = vmatprep.subr.mxu0 0.0
        %518 = vmatpush1.msra.mxu0 0.0
        %519 = vmatprep.subr.mxu0 0.0
        %520 = vmatpush1.msra.mxu0 0.0
        %521 = vmatprep.subr.mxu0 0.0
        %522 = vmatpush1.msra.mxu0 0.0
        %523 = vmatprep.subr.mxu0 0.0
        %524 = vmatpush1.msra.mxu0 0.0
        %525 = vmatprep.subr.mxu0 0.0
        %526 = vmatpush1.msra.mxu0 0.0
        %527 = vmatprep.subr.mxu0 0.0
        %528 = vmatpush1.msra.mxu0 0.0
        %529 = vmatprep.subr.mxu0 0.0
        %530 = vmatpush1.msra.mxu0 0.0
        %531 = vmatprep.subr.mxu0 0.0
        %532 = vmatpush1.msra.mxu0 0.0
        %533 = vmatprep.subr.mxu0 0.0
        %534 = vmatpush1.msra.mxu0 0.0
        %535 = vmatprep.subr.mxu0 0.0
        %536 = vmatpush1.msra.mxu0 0.0
        %537 = vmatprep.subr.mxu0 0.0
        %538 = vmatpush1.msra.mxu0 0.0
        %539 = vmatprep.subr.mxu0 0.0
        %540 = vmatpush1.msra.mxu0 0.0
        %541 = vmatprep.subr.mxu0 0.0
        %542 = vmatpush1.msra.mxu0 0.0
        %543 = vmatprep.subr.mxu0 0.0
        %544 = vmatpush1.msra.mxu0 0.0
        %545 = vmatprep.subr.mxu0 0.0
        %546 = vmatpush1.msra.mxu0 0.0
        %547 = vmatprep.subr.mxu0 0.0
        %548 = vmatpush1.msra.mxu0 0.0
        %549 = vmatprep.subr.mxu0 0.0
        %550 = vmatpush1.msra.mxu0 0.0
        %551 = vmatprep.subr.mxu0 0.0
        %552 = vmatpush1.msra.mxu0 0.0
        %553 = vmatprep.subr.mxu0 0.0
        %554 = vmatpush1.msra.mxu0 0.0
        %555 = vmatprep.subr.mxu0 0.0
        %556 = vmatpush1.msra.mxu0 0.0
        %557 = vmatprep.mubr.f32.mxu0 0.0
        %558 = vmatmul.mubr.f32.gmra.mrb[0].mxu0 %v491
        %v559 = vpop.f32.mrb[0].mxu0
        %v560 = vadd.f32 0.0, %v559
        %v561 = vpop.f32.mrb[0].mxu0
        %v562 = vadd.f32 0.0, %v561
        %563 = vdwg.mxu0
        %564 = vmatprep.subr.mxu0 0.0
        %565 = vmatpush1.msra.mxu0 %v388
        %566 = vmatprep.subr.mxu0 0.0
        %567 = vmatpush1.msra.mxu0 %v397
        %568 = vmatprep.subr.mxu0 0.0
        %569 = vmatpush1.msra.mxu0 %v409
        %570 = vmatprep.subr.mxu0 0.0
        %571 = vmatpush1.msra.mxu0 %v421
        %572 = vmatprep.subr.mxu0 0.0
        %573 = vmatpush1.msra.mxu0 %v433
        %574 = vmatprep.subr.mxu0 0.0
        %575 = vmatpush1.msra.mxu0 %v445
        %576 = vmatprep.subr.mxu0 0.0
        %577 = vmatpush1.msra.mxu0 %v457
        %578 = vmatprep.subr.mxu0 0.0
        %579 = vmatpush1.msra.mxu0 %v469
        %580 = vmatprep.subr.mxu0 0.0
        %581 = vmatpush1.msra.mxu0 %v481
        %582 = vmatprep.subr.mxu0 0.0
        %583 = vmatpush1.msra.mxu0 0.0
        %584 = vmatprep.subr.mxu0 0.0
        %585 = vmatpush1.msra.mxu0 0.0
        %586 = vmatprep.subr.mxu0 0.0
        %587 = vmatpush1.msra.mxu0 0.0
        %588 = vmatprep.subr.mxu0 0.0
        %589 = vmatpush1.msra.mxu0 0.0
        %590 = vmatprep.subr.mxu0 0.0
        %591 = vmatpush1.msra.mxu0 0.0
        %592 = vmatprep.subr.mxu0 0.0
        %593 = vmatpush1.msra.mxu0 0.0
        %594 = vmatprep.subr.mxu0 0.0
        %595 = vmatpush1.msra.mxu0 0.0
        %596 = vmatprep.subr.mxu0 0.0
        %597 = vmatpush1.msra.mxu0 0.0
        %598 = vmatprep.subr.mxu0 0.0
        %599 = vmatpush1.msra.mxu0 0.0
        %600 = vmatprep.subr.mxu0 0.0
        %601 = vmatpush1.msra.mxu0 0.0
        %602 = vmatprep.subr.mxu0 0.0
        %603 = vmatpush1.msra.mxu0 0.0
        %604 = vmatprep.subr.mxu0 0.0
        %605 = vmatpush1.msra.mxu0 0.0
        %606 = vmatprep.subr.mxu0 0.0
        %607 = vmatpush1.msra.mxu0 0.0
        %608 = vmatprep.subr.mxu0 0.0
        %609 = vmatpush1.msra.mxu0 0.0
        %610 = vmatprep.subr.mxu0 0.0
        %611 = vmatpush1.msra.mxu0 0.0
        %612 = vmatprep.subr.mxu0 0.0
        %613 = vmatpush1.msra.mxu0 0.0
        %614 = vmatprep.subr.mxu0 0.0
        %615 = vmatpush1.msra.mxu0 0.0
        %616 = vmatprep.subr.mxu0 0.0
        %617 = vmatpush1.msra.mxu0 0.0
        %618 = vmatprep.subr.mxu0 0.0
        %619 = vmatpush1.msra.mxu0 0.0
        %620 = vmatprep.subr.mxu0 0.0
        %621 = vmatpush1.msra.mxu0 0.0
        %622 = vmatprep.subr.mxu0 0.0
        %623 = vmatpush1.msra.mxu0 0.0
        %624 = vmatprep.subr.mxu0 0.0
        %625 = vmatpush1.msra.mxu0 0.0
        %626 = vmatprep.subr.mxu0 0.0
        %627 = vmatpush1.msra.mxu0 0.0
        %628 = vmatprep.mubr.f32.mxu0 0.0
        %629 = vmatmul.mubr.f32.gmra.mrb[0].mxu0 %v491
        %v630 = vpop.f32.mrb[0].mxu0
        %v631 = vadd.f32 0.0, %v630
        %v632 = vpop.f32.mrb[0].mxu0
        %633 = vdwg.mxu0
        %v634 = vld [vmem:[%s2] sm:$0xff]
        %636 = vset.pattern.permute.xlu0 0
        %637 = vperm.xlu0 %636, %v634
        %v638 = vpop.permute.xlu0 %637
        %v640 = vmul.f32 %v560, %v638
        %v641 = vmul.f32 %v562, %v638
        %v642 = vmul.f32 %v631, %v638
        %v643 = vld [vmem:[%s3] sm:$0xff]
        %645 = vset.pattern.permute.xlu0 0
        %646 = vperm.xlu0 %645, %v643
        %v647 = vpop.permute.xlu0 %646
        %v649 = vadd.f32 %v640, %v647
        %v650 = vadd.f32 %v641, %v647
        %v651 = vadd.f32 %v642, %v647
        %v652 = vmax.f32 %v649, 0.0
        %v653 = vmax.f32 %v650, 0.0
        %v654 = vmax.f32 %v651, 0.0
        %v656 = vlaneseq
        %v657 = vshrl.u32 %v656, 7
        %v658 = vsub.s32 0, %v657
        %v659 = vrot.slane %v385, %v658
        %v660 = vlaneseq
        %v661 = vshrl.u32 %v660, 7
        %v662 = vsub.s32 1, %v661
        %v663 = vrot.slane %v385, %v662
        %v664 = vlaneseq
        %v665 = vshrl.u32 %v664, 7
        %v666 = vsub.s32 2, %v665
        %v667 = vrot.slane %v385, %v666
        %v671 = vmul.f32 %v652, %v659
        %v672 = vmul.f32 %v653, %v663
        %v673 = vmul.f32 %v654, %v667
        %677 = vrot.lane.b32.xlu0 %v671, 127
        %v678 = vpop.permute.xlu0 %677
        %679 = vrot.lane.b32.xlu0 %v672, 127
        %v680 = vpop.permute.xlu0 %679
        %681 = vrot.lane.b32.xlu0 %v673, 127
        %v682 = vpop.permute.xlu0 %681
        %v683 = vsel %vm398, %v678, %v680
        %v684 = vsel %vm398, %v680, %v682
        %688 = vrot.lane.b32.xlu0 %v671, 126
        %v689 = vpop.permute.xlu0 %688
        %690 = vrot.lane.b32.xlu0 %v672, 126
        %v691 = vpop.permute.xlu0 %690
        %692 = vrot.lane.b32.xlu0 %v673, 126
        %v693 = vpop.permute.xlu0 %692
        %v694 = vsel %vm410, %v689, %v691
        %v695 = vsel %vm410, %v691, %v693
        %699 = vrot.lane.b32.xlu0 %v671, 110
        %v700 = vpop.permute.xlu0 %699
        %701 = vrot.lane.b32.xlu0 %v672, 110
        %v702 = vpop.permute.xlu0 %701
        %703 = vrot.lane.b32.xlu0 %v673, 110
        %v704 = vpop.permute.xlu0 %703
        %v705 = vsel %vm422, %v700, %v702
        %v706 = vsel %vm422, %v702, %v704
        %710 = vrot.lane.b32.xlu0 %v671, 109
        %v711 = vpop.permute.xlu0 %710
        %712 = vrot.lane.b32.xlu0 %v672, 109
        %v713 = vpop.permute.xlu0 %712
        %714 = vrot.lane.b32.xlu0 %v673, 109
        %v715 = vpop.permute.xlu0 %714
        %v716 = vsel %vm434, %v711, %v713
        %v717 = vsel %vm434, %v713, %v715
        %721 = vrot.lane.b32.xlu0 %v671, 108
        %v722 = vpop.permute.xlu0 %721
        %723 = vrot.lane.b32.xlu0 %v672, 108
        %v724 = vpop.permute.xlu0 %723
        %725 = vrot.lane.b32.xlu0 %v673, 108
        %v726 = vpop.permute.xlu0 %725
        %v727 = vsel %vm446, %v722, %v724
        %v728 = vsel %vm446, %v724, %v726
        %732 = vrot.lane.b32.xlu0 %v671, 92
        %v733 = vpop.permute.xlu0 %732
        %734 = vrot.lane.b32.xlu0 %v672, 92
        %v735 = vpop.permute.xlu0 %734
        %736 = vrot.lane.b32.xlu0 %v673, 92
        %v737 = vpop.permute.xlu0 %736
        %v738 = vsel %vm458, %v733, %v735
        %v739 = vsel %vm458, %v735, %v737
        %743 = vrot.lane.b32.xlu0 %v671, 91
        %v744 = vpop.permute.xlu0 %743
        %745 = vrot.lane.b32.xlu0 %v672, 91
        %v746 = vpop.permute.xlu0 %745
        %747 = vrot.lane.b32.xlu0 %v673, 91
        %v748 = vpop.permute.xlu0 %747
        %v749 = vsel %vm470, %v744, %v746
        %v750 = vsel %vm470, %v746, %v748
        %754 = vrot.lane.b32.xlu0 %v671, 90
        %v755 = vpop.permute.xlu0 %754
        %756 = vrot.lane.b32.xlu0 %v672, 90
        %v757 = vpop.permute.xlu0 %756
        %758 = vrot.lane.b32.xlu0 %v673, 90
        %v759 = vpop.permute.xlu0 %758
        %v760 = vsel %vm482, %v755, %v757
        %v761 = vsel %vm482, %v757, %v759
        %v765 = vld [vmem:[%s4] sm:$0xff]
        %v767 = vsel %vm489, %v765, 0
        %769 = vmatprep.subr.mxu0 %v672
        %770 = vmatpush1.msra.mxu0 %v671
        %771 = vmatprep.subr.mxu0 %v684
        %772 = vmatpush1.msra.mxu0 %v683
        %773 = vmatprep.subr.mxu0 %v695
        %774 = vmatpush1.msra.mxu0 %v694
        %775 = vmatprep.subr.mxu0 %v706
        %776 = vmatpush1.msra.mxu0 %v705
        %777 = vmatprep.subr.mxu0 %v717
        %778 = vmatpush1.msra.mxu0 %v716
        %779 = vmatprep.subr.mxu0 %v728
        %780 = vmatpush1.msra.mxu0 %v727
        %781 = vmatprep.subr.mxu0 %v739
        %782 = vmatpush1.msra.mxu0 %v738
        %783 = vmatprep.subr.mxu0 %v750
        %784 = vmatpush1.msra.mxu0 %v749
        %785 = vmatprep.subr.mxu0 %v761
        %786 = vmatpush1.msra.mxu0 %v760
        %787 = vmatprep.subr.mxu0 0.0
        %788 = vmatpush1.msra.mxu0 0.0
        %789 = vmatprep.subr.mxu0 0.0
        %790 = vmatpush1.msra.mxu0 0.0
        %791 = vmatprep.subr.mxu0 0.0
        %792 = vmatpush1.msra.mxu0 0.0
        %793 = vmatprep.subr.mxu0 0.0
        %794 = vmatpush1.msra.mxu0 0.0
        %795 = vmatprep.subr.mxu0 0.0
        %796 = vmatpush1.msra.mxu0 0.0
        %797 = vmatprep.subr.mxu0 0.0
        %798 = vmatpush1.msra.mxu0 0.0
        %799 = vmatprep.subr.mxu0 0.0
        %800 = vmatpush1.msra.mxu0 0.0
        %801 = vmatprep.subr.mxu0 0.0
        %802 = vmatpush1.msra.mxu0 0.0
        %803 = vmatprep.subr.mxu0 0.0
        %804 = vmatpush1.msra.mxu0 0.0
        %805 = vmatprep.subr.mxu0 0.0
        %806 = vmatpush1.msra.mxu0 0.0
        %807 = vmatprep.subr.mxu0 0.0
        %808 = vmatpush1.msra.mxu0 0.0
        %809 = vmatprep.subr.mxu0 0.0
        %810 = vmatpush1.msra.mxu0 0.0
        %811 = vmatprep.subr.mxu0 0.0
        %812 = vmatpush1.msra.mxu0 0.0
        %813 = vmatprep.subr.mxu0 0.0
        %814 = vmatpush1.msra.mxu0 0.0
        %815 = vmatprep.subr.mxu0 0.0
        %816 = vmatpush1.msra.mxu0 0.0
        %817 = vmatprep.subr.mxu0 0.0
        %818 = vmatpush1.msra.mxu0 0.0
        %819 = vmatprep.subr.mxu0 0.0
        %820 = vmatpush1.msra.mxu0 0.0
        %821 = vmatprep.subr.mxu0 0.0
        %822 = vmatpush1.msra.mxu0 0.0
        %823 = vmatprep.subr.mxu0 0.0
        %824 = vmatpush1.msra.mxu0 0.0
        %825 = vmatprep.subr.mxu0 0.0
        %826 = vmatpush1.msra.mxu0 0.0
        %827 = vmatprep.subr.mxu0 0.0
        %828 = vmatpush1.msra.mxu0 0.0
        %829 = vmatprep.subr.mxu0 0.0
        %830 = vmatpush1.msra.mxu0 0.0
        %831 = vmatprep.subr.mxu0 0.0
        %832 = vmatpush1.msra.mxu0 0.0
        %833 = vmatprep.mubr.f32.mxu0 0.0
        %834 = vmatmul.mubr.f32.gmra.mrb[0].mxu0 %v767
        %v835 = vpop.f32.mrb[0].mxu0
        %v836 = vadd.f32 0.0, %v835
        %v837 = vpop.f32.mrb[0].mxu0
        %v838 = vadd.f32 0.0, %v837
        %839 = vdwg.mxu0
        %840 = vmatprep.subr.mxu0 0.0
        %841 = vmatpush1.msra.mxu0 %v673
        %842 = vmatprep.subr.mxu0 0.0
        %843 = vmatpush1.msra.mxu0 %v682
        %844 = vmatprep.subr.mxu0 0.0
        %845 = vmatpush1.msra.mxu0 %v693
        %846 = vmatprep.subr.mxu0 0.0
        %847 = vmatpush1.msra.mxu0 %v704
        %848 = vmatprep.subr.mxu0 0.0
        %849 = vmatpush1.msra.mxu0 %v715
        %850 = vmatprep.subr.mxu0 0.0
        %851 = vmatpush1.msra.mxu0 %v726
        %852 = vmatprep.subr.mxu0 0.0
        %853 = vmatpush1.msra.mxu0 %v737
        %854 = vmatprep.subr.mxu0 0.0
        %855 = vmatpush1.msra.mxu0 %v748
        %856 = vmatprep.subr.mxu0 0.0
        %857 = vmatpush1.msra.mxu0 %v759
        %858 = vmatprep.subr.mxu0 0.0
        %859 = vmatpush1.msra.mxu0 0.0
        %860 = vmatprep.subr.mxu0 0.0
        %861 = vmatpush1.msra.mxu0 0.0
        %862 = vmatprep.subr.mxu0 0.0
        %863 = vmatpush1.msra.mxu0 0.0
        %864 = vmatprep.subr.mxu0 0.0
        %865 = vmatpush1.msra.mxu0 0.0
        %866 = vmatprep.subr.mxu0 0.0
        %867 = vmatpush1.msra.mxu0 0.0
        %868 = vmatprep.subr.mxu0 0.0
        %869 = vmatpush1.msra.mxu0 0.0
        %870 = vmatprep.subr.mxu0 0.0
        %871 = vmatpush1.msra.mxu0 0.0
        %872 = vmatprep.subr.mxu0 0.0
        %873 = vmatpush1.msra.mxu0 0.0
        %874 = vmatprep.subr.mxu0 0.0
        %875 = vmatpush1.msra.mxu0 0.0
        %876 = vmatprep.subr.mxu0 0.0
        %877 = vmatpush1.msra.mxu0 0.0
        %878 = vmatprep.subr.mxu0 0.0
        %879 = vmatpush1.msra.mxu0 0.0
        %880 = vmatprep.subr.mxu0 0.0
        %881 = vmatpush1.msra.mxu0 0.0
        %882 = vmatprep.subr.mxu0 0.0
        %883 = vmatpush1.msra.mxu0 0.0
        %884 = vmatprep.subr.mxu0 0.0
        %885 = vmatpush1.msra.mxu0 0.0
        %886 = vmatprep.subr.mxu0 0.0
        %887 = vmatpush1.msra.mxu0 0.0
        %888 = vmatprep.subr.mxu0 0.0
        %889 = vmatpush1.msra.mxu0 0.0
        %890 = vmatprep.subr.mxu0 0.0
        %891 = vmatpush1.msra.mxu0 0.0
        %892 = vmatprep.subr.mxu0 0.0
        %893 = vmatpush1.msra.mxu0 0.0
        %894 = vmatprep.subr.mxu0 0.0
        %895 = vmatpush1.msra.mxu0 0.0
        %896 = vmatprep.subr.mxu0 0.0
        %897 = vmatpush1.msra.mxu0 0.0
        %898 = vmatprep.subr.mxu0 0.0
        %899 = vmatpush1.msra.mxu0 0.0
        %900 = vmatprep.subr.mxu0 0.0
        %901 = vmatpush1.msra.mxu0 0.0
        %902 = vmatprep.subr.mxu0 0.0
        %903 = vmatpush1.msra.mxu0 0.0
        %904 = vmatprep.mubr.f32.mxu0 0.0
        %905 = vmatmul.mubr.f32.gmra.mrb[0].mxu0 %v767
        %v906 = vpop.f32.mrb[0].mxu0
        %v907 = vadd.f32 0.0, %v906
        %v908 = vpop.f32.mrb[0].mxu0
        %909 = vdwg.mxu0
        %v910 = vld [vmem:[%s5] sm:$0xff]
        %912 = vset.pattern.permute.xlu0 0
        %913 = vperm.xlu0 %912, %v910
        %v914 = vpop.permute.xlu0 %913
        %v916 = vmul.f32 %v836, %v914
        %v917 = vmul.f32 %v838, %v914
        %v918 = vmul.f32 %v907, %v914
        %v919 = vld [vmem:[%s6] sm:$0xff]
        %921 = vset.pattern.permute.xlu0 0
        %922 = vperm.xlu0 %921, %v919
        %v923 = vpop.permute.xlu0 %922
        %v925 = vadd.f32 %v916, %v923
        %v926 = vadd.f32 %v917, %v923
        %v927 = vadd.f32 %v918, %v923
        %v928 = vld [vmem:[%s7] sm:$0xff]
        %vm929 = vcmask 64512
        %v931 = vsel %vm929, %v928, 0
        %933 = vmatprep.subr.mxu0 %v484
        %934 = vmatpush1.msra.mxu0 %v483
        %935 = vmatprep.subr.mxu0 0.0
        %936 = vmatpush1.msra.mxu0 0.0
        %937 = vmatprep.subr.mxu0 0.0
        %938 = vmatpush1.msra.mxu0 0.0
        %939 = vmatprep.subr.mxu0 0.0
        %940 = vmatpush1.msra.mxu0 0.0
        %941 = vmatprep.subr.mxu0 0.0
        %942 = vmatpush1.msra.mxu0 0.0
        %943 = vmatprep.subr.mxu0 0.0
        %944 = vmatpush1.msra.mxu0 0.0
        %945 = vmatprep.subr.mxu0 0.0
        %946 = vmatpush1.msra.mxu0 0.0
        %947 = vmatprep.subr.mxu0 0.0
        %948 = vmatpush1.msra.mxu0 0.0
        %949 = vmatprep.subr.mxu0 0.0
        %950 = vmatpush1.msra.mxu0 0.0
        %951 = vmatprep.subr.mxu0 0.0
        %952 = vmatpush1.msra.mxu0 0.0
        %953 = vmatprep.subr.mxu0 0.0
        %954 = vmatpush1.msra.mxu0 0.0
        %955 = vmatprep.subr.mxu0 0.0
        %956 = vmatpush1.msra.mxu0 0.0
        %957 = vmatprep.subr.mxu0 0.0
        %958 = vmatpush1.msra.mxu0 0.0
        %959 = vmatprep.subr.mxu0 0.0
        %960 = vmatpush1.msra.mxu0 0.0
        %961 = vmatprep.subr.mxu0 0.0
        %962 = vmatpush1.msra.mxu0 0.0
        %963 = vmatprep.subr.mxu0 0.0
        %964 = vmatpush1.msra.mxu0 0.0
        %965 = vmatprep.subr.mxu0 0.0
        %966 = vmatpush1.msra.mxu0 0.0
        %967 = vmatprep.subr.mxu0 0.0
        %968 = vmatpush1.msra.mxu0 0.0
        %969 = vmatprep.subr.mxu0 0.0
        %970 = vmatpush1.msra.mxu0 0.0
        %971 = vmatprep.subr.mxu0 0.0
        %972 = vmatpush1.msra.mxu0 0.0
        %973 = vmatprep.subr.mxu0 0.0
        %974 = vmatpush1.msra.mxu0 0.0
        %975 = vmatprep.subr.mxu0 0.0
        %976 = vmatpush1.msra.mxu0 0.0
        %977 = vmatprep.subr.mxu0 0.0
        %978 = vmatpush1.msra.mxu0 0.0
        %979 = vmatprep.subr.mxu0 0.0
        %980 = vmatpush1.msra.mxu0 0.0
        %981 = vmatprep.subr.mxu0 0.0
        %982 = vmatpush1.msra.mxu0 0.0
        %983 = vmatprep.subr.mxu0 0.0
        %984 = vmatpush1.msra.mxu0 0.0
        %985 = vmatprep.subr.mxu0 0.0
        %986 = vmatpush1.msra.mxu0 0.0
        %987 = vmatprep.subr.mxu0 0.0
        %988 = vmatpush1.msra.mxu0 0.0
        %989 = vmatprep.subr.mxu0 0.0
        %990 = vmatpush1.msra.mxu0 0.0
        %991 = vmatprep.subr.mxu0 0.0
        %992 = vmatpush1.msra.mxu0 0.0
        %993 = vmatprep.subr.mxu0 0.0
        %994 = vmatpush1.msra.mxu0 0.0
        %995 = vmatprep.subr.mxu0 0.0
        %996 = vmatpush1.msra.mxu0 0.0
        %997 = vmatprep.mubr.f32.mxu0 0.0
        %998 = vmatmul.mubr.f32.gmra.mrb[0].mxu0 %v931
        %v999 = vpop.f32.mrb[0].mxu0
        %v1000 = vadd.f32 0.0, %v999
        %v1001 = vpop.f32.mrb[0].mxu0
        %v1002 = vadd.f32 0.0, %v1001
        %1003 = vdwg.mxu0
        %1004 = vmatprep.subr.mxu0 0.0
        %1005 = vmatpush1.msra.mxu0 %v481
        %1006 = vmatprep.subr.mxu0 0.0
        %1007 = vmatpush1.msra.mxu0 0.0
        %1008 = vmatprep.subr.mxu0 0.0
        %1009 = vmatpush1.msra.mxu0 0.0
        %1010 = vmatprep.subr.mxu0 0.0
        %1011 = vmatpush1.msra.mxu0 0.0
        %1012 = vmatprep.subr.mxu0 0.0
        %1013 = vmatpush1.msra.mxu0 0.0
        %1014 = vmatprep.subr.mxu0 0.0
        %1015 = vmatpush1.msra.mxu0 0.0
        %1016 = vmatprep.subr.mxu0 0.0
        %1017 = vmatpush1.msra.mxu0 0.0
        %1018 = vmatprep.subr.mxu0 0.0
        %1019 = vmatpush1.msra.mxu0 0.0
        %1020 = vmatprep.subr.mxu0 0.0
        %1021 = vmatpush1.msra.mxu0 0.0
        %1022 = vmatprep.subr.mxu0 0.0
        %1023 = vmatpush1.msra.mxu0 0.0
        %1024 = vmatprep.subr.mxu0 0.0
        %1025 = vmatpush1.msra.mxu0 0.0
        %1026 = vmatprep.subr.mxu0 0.0
        %1027 = vmatpush1.msra.mxu0 0.0
        %1028 = vmatprep.subr.mxu0 0.0
        %1029 = vmatpush1.msra.mxu0 0.0
        %1030 = vmatprep.subr.mxu0 0.0
        %1031 = vmatpush1.msra.mxu0 0.0
        %1032 = vmatprep.subr.mxu0 0.0
        %1033 = vmatpush1.msra.mxu0 0.0
        %1034 = vmatprep.subr.mxu0 0.0
        %1035 = vmatpush1.msra.mxu0 0.0
        %1036 = vmatprep.subr.mxu0 0.0
        %1037 = vmatpush1.msra.mxu0 0.0
        %1038 = vmatprep.subr.mxu0 0.0
        %1039 = vmatpush1.msra.mxu0 0.0
        %1040 = vmatprep.subr.mxu0 0.0
        %1041 = vmatpush1.msra.mxu0 0.0
        %1042 = vmatprep.subr.mxu0 0.0
        %1043 = vmatpush1.msra.mxu0 0.0
        %1044 = vmatprep.subr.mxu0 0.0
        %1045 = vmatpush1.msra.mxu0 0.0
        %1046 = vmatprep.subr.mxu0 0.0
        %1047 = vmatpush1.msra.mxu0 0.0
        %1048 = vmatprep.subr.mxu0 0.0
        %1049 = vmatpush1.msra.mxu0 0.0
        %1050 = vmatprep.subr.mxu0 0.0
        %1051 = vmatpush1.msra.mxu0 0.0
        %1052 = vmatprep.subr.mxu0 0.0
        %1053 = vmatpush1.msra.mxu0 0.0
        %1054 = vmatprep.subr.mxu0 0.0
        %1055 = vmatpush1.msra.mxu0 0.0
        %1056 = vmatprep.subr.mxu0 0.0
        %1057 = vmatpush1.msra.mxu0 0.0
        %1058 = vmatprep.subr.mxu0 0.0
        %1059 = vmatpush1.msra.mxu0 0.0
        %1060 = vmatprep.subr.mxu0 0.0
        %1061 = vmatpush1.msra.mxu0 0.0
        %1062 = vmatprep.subr.mxu0 0.0
        %1063 = vmatpush1.msra.mxu0 0.0
        %1064 = vmatprep.subr.mxu0 0.0
        %1065 = vmatpush1.msra.mxu0 0.0
        %1066 = vmatprep.subr.mxu0 0.0
        %1067 = vmatpush1.msra.mxu0 0.0
        %1068 = vmatprep.mubr.f32.mxu0 0.0
        %1069 = vmatmul.mubr.f32.gmra.mrb[0].mxu0 %v931
        %v1070 = vpop.f32.mrb[0].mxu0
        %v1071 = vadd.f32 0.0, %v1070
        %v1072 = vpop.f32.mrb[0].mxu0
        %1073 = vdwg.mxu0
        %v1074 = vld [vmem:[%s8] sm:$0xff]
        %1076 = vset.pattern.permute.xlu0 0
        %1077 = vperm.xlu0 %1076, %v1074
        %v1078 = vpop.permute.xlu0 %1077
        %v1080 = vmul.f32 %v1000, %v1078
        %v1081 = vmul.f32 %v1002, %v1078
        %v1082 = vmul.f32 %v1071, %v1078
        %v1083 = vld [vmem:[%s9] sm:$0xff]
        %1085 = vset.pattern.permute.xlu0 0
        %1086 = vperm.xlu0 %1085, %v1083
        %v1087 = vpop.permute.xlu0 %1086
        %v1089 = vadd.f32 %v1080, %v1087
        %v1090 = vadd.f32 %v1081, %v1087
        %v1091 = vadd.f32 %v1082, %v1087
        %v1092 = vadd.f32 %v925, %v1089
        %v1093 = vadd.f32 %v926, %v1090
        %v1094 = vadd.f32 %v927, %v1091
        %v1095 = vmax.f32 %v1092, 0.0
        %v1096 = vmax.f32 %v1093, 0.0
        %v1097 = vmax.f32 %v1094, 0.0
        %1098 = vst [vmem:[%s379] sm:$0xff] %v1095
        %1099 = vst [vmem:[%s379 + $0x8] sm:$0xff] %v1096
        %vm1100 = vcmask 244736
        %1101 = vst.msk [vmem:[%s379 + $0x10] sm:$0xff] %vm1100, %v1097
        %s1102 = sand.u32 %s269, 1
        %s1103 = scalar_lea.sflag [#allocation3], %s1102
        %s1104 = sand.u32 %s269, 1
        %s1105 = smul.addr %s1104, 24
        %s1106 = scalar_lea.vmem [#allocation2], %s1105
        // Predicated region
        $region65: #{tpu_custom_call.1} parent=63 // pred_check
          %p1107 = pneg %p279
        $region66: #{tpu_custom_call.1} parent=63 // pred_check_branch
          %1109 = sbr.rel (%p1107) target = $region68
        $region67: #{tpu_custom_call.1} parent=63 // pred_region
          %s1111 = ssub.s32 384, 384
          %1112 = vsyncadd %s1103, %s1111
          %s1113 = smul.addr %s25, 3
          %s1114 = smul.addr %s1113, 128
          %s1115 = scalar_lea.hbm %s11, %s1114
          %s1117 = sshll.u32 %s1106, 4
          %s1118 = int_to_ptr.vmem [resolvable:$true] %s1117
          %1120 = dma.vmem_to_hbm [thread:$0]  %s1118, 384, %s1115, %s1103
        $region68: #{tpu_custom_call.1} parent=63 // pred_fallthru
          _
      $region64: #{tpu_custom_call.1} parent=5 // pred_fallthru
        _
      %p1121 = scmp.le.s32.totalorder 2, %s20
      // Predicated region
      $region69: #{tpu_custom_call.1} parent=5 // pred_check
        %p1122 = pneg %p1121
      $region70: #{tpu_custom_call.1} parent=5 // pred_check_branch
        %1124 = sbr.rel (%p1122) target = $region72
      $region71: #{tpu_custom_call.1} parent=5 // pred_region
        %s1125 = ssub.s32 %s20, 2
        // Predicated region
        $region73: #{tpu_custom_call.1} parent=71 // pred_check
          %p1126 = pneg %p285
        $region74: #{tpu_custom_call.1} parent=71 // pred_check_branch
          %1128 = sbr.rel (%p1126) target = $region76
        $region75: #{tpu_custom_call.1} parent=71 // pred_region
          %s1129 = sand.u32 %s270, 1
          %s1130 = scalar_lea.sflag [#allocation3], %s1129
          %s1131 = sand.u32 %s270, 1
          %s1132 = smul.addr %s1131, 24
          %s1133 = scalar_lea.vmem [#allocation2], %s1132
          %1134 = dma.done %s1130, 384
        $region76: #{tpu_custom_call.1} parent=71 // pred_fallthru
          _
      $region72: #{tpu_custom_call.1} parent=5 // pred_fallthru
        _
    $region6: #{tpu_custom_call.1} parent=1 // loop_footer
      %s24 = sadd.s32 1, %s20
    $region7: #{tpu_custom_call.1} parent=1 // loop_footer_branch
      %19 = sbr.rel target = $region3
    $region8: #{tpu_custom_call.1} parent=1 // loop_exit
      _
    %1135 = vsyncpa [#allocation3], 1
    %s1136 = scalar_lea.sflag [#allocation3], 1
    %1137 = vsyncpa %s1136, 1

</llo_original>
